<compile_context>
chip_gen: v6e
topology: v6e:2x2x1
jax: 0.10.0
libtpu: 0.0.40
codegen_flags: <defaults>
</compile_context>

<pallas_src>
import math
from functools import partial

import jax
import jax.numpy as jnp
from jax.experimental import pallas as pl
from jax.experimental.pallas import tpu as pltpu


def build_pe_table(d_model: int, max_len: int = 5000) -> jnp.ndarray:
    """Deterministic sinusoidal PE buffer, identical to the torch __init__."""
    position = jnp.arange(0, max_len, dtype=jnp.float32)[:, None]              # (L, 1)
    div_term = jnp.exp(
        jnp.arange(0, d_model, 2, dtype=jnp.float32) * -(math.log(10000.0) / d_model)
    )                                                                          # (D/2,)
    ang = position * div_term                                                  # (L, D/2)
    pe = jnp.zeros((max_len, d_model), dtype=jnp.float32)
    pe = pe.at[:, 0::2].set(jnp.sin(ang))
    pe = pe.at[:, 1::2].set(jnp.cos(ang))
    return pe[None]                                                            # (1, L, D)


def _pe_dropout_kernel(seed_ref, x_ref, pe_ref, o_ref, *, p: float,
                       training: bool, n_cols: int):
    # x_ref: (tile_b, tile_n) lane-dense slab; pe_ref: (1, tile_n) broadcast row.
    y = x_ref[...] + pe_ref[...]

    if training and p > 0.0:
        tb, tn = x_ref.shape
        i = pl.program_id(0)
        j = pl.program_id(1)
        # Global flat element index -> tiling-invariant dropout mask.
        rows = jax.lax.broadcasted_iota(jnp.int32, (tb, tn), 0) + i * tb
        cols = jax.lax.broadcasted_iota(jnp.int32, (tb, tn), 1) + j * tn
        idx = (rows * n_cols + cols).astype(jnp.uint32)
        # lowbias32-style integer mix (pure VPU int ops; works on TPU & interpret).
        h = idx + seed_ref[0].astype(jnp.uint32)
        h = h ^ (h >> 16)
        h = h * jnp.uint32(0x7FEB352D)
        h = h ^ (h >> 15)
        h = h * jnp.uint32(0x846CA68B)
        h = h ^ (h >> 16)
        # Integer threshold compare: P(drop) = thresh / 2^32 ~= p.
        thresh = jnp.uint32(min(int(p * 4294967296.0), 4294967295))
        keep = h >= thresh
        y = jnp.where(keep, y * (1.0 / (1.0 - p)), 0.0)

    o_ref[...] = y.astype(o_ref.dtype)


def _pick_tile(n: int, target: int, align: int) -> int:
    """Largest divisor of n that is a multiple of `align` and <= target, else n."""
    if n <= target or n % align != 0:
        return n
    t = max((target // align) * align, align)
    while t >= align:
        if n % t == 0:
            return t
        t -= align
    return n


# Tile sizing targets (keep each x tile ~1-4 MiB; pipelined VMEM << 32 MiB
# so the same code is safe on v7x's smaller VMEM as well as v5e/v6e).
_TARGET_LANE_ELEMS = 256 * 1024          # per-row slab of the flattened axis
_TARGET_TILE_BYTES = 4 * 1024 * 1024     # per x tile


def positional_encoding_forward(x, pe_table, *, p: float = 0.1,
                                training: bool = False, seed: int = 0):
    """x: (B, S, D); pe_table: (1, max_len, D).  Returns (B, S, D)."""
    B, S, D = x.shape
    N = S * D

    # Lane-dense views: (B, S*D) for x/out, (1, S*D) for the shared PE row.
    x2 = x.reshape(B, N)
    pe_flat = pe_table[0, :S, :].reshape(1, N).astype(x.dtype)
    seed_arr = jnp.asarray([seed], dtype=jnp.int32)

    tile_n = _pick_tile(N, _TARGET_LANE_ELEMS, 128)
    bytes_per_row = tile_n * jnp.dtype(x.dtype).itemsize
    tile_b = _pick_tile(B, max(1, _TARGET_TILE_BYTES // max(bytes_per_row, 1)), 8)

    grid = (B // tile_b, N // tile_n)
    kernel = partial(_pe_dropout_kernel, p=float(p), training=bool(training),
                     n_cols=N)

    out2 = pl.pallas_call(
        kernel,
        out_shape=jax.ShapeDtypeStruct((B, N), x.dtype),
        grid_spec=pltpu.PrefetchScalarGridSpec(
            num_scalar_prefetch=1,
            grid=grid,
            in_specs=[
                pl.BlockSpec((tile_b, tile_n), lambda i, j, seed: (i, j)),  # x slab
                pl.BlockSpec((1, tile_n), lambda i, j, seed: (0, j)),       # pe row
            ],
            out_specs=pl.BlockSpec((tile_b, tile_n), lambda i, j, seed: (i, j)),
        ),
        compiler_params=pltpu.CompilerParams(
            dimension_semantics=("parallel", "parallel"),  # no carried state
            vmem_limit_bytes=32 * 1024 * 1024,
        ),
    )(seed_arr, x2, pe_flat)

    return out2.reshape(B, S, D)


if __name__ == "__main__":
    B, S, D = 2, 8, 32
    p_drop = 0.1

    key = jax.random.PRNGKey(0)
    x = jax.random.normal(key, (B, S, D), dtype=jnp.float32)

    pe_table = build_pe_table(D, max_len=5000)

    # Eval mode (dropout = identity): check against plain-JAX reference.
    out_eval = positional_encoding_forward(x, pe_table, p=p_drop, training=False)
    out_eval = jax.block_until_ready(out_eval)
    ref = x + pe_table[:, :S, :]
    assert out_eval.shape == (B, S, D)
    assert jnp.allclose(out_eval, ref, atol=1e-6), "mismatch vs reference add"

    # Training mode: deterministic stateless-hash dropout.
    out_train = positional_encoding_forward(x, pe_table, p=p_drop,
                                            training=True, seed=1234)
    out_train = jax.block_until_ready(out_train)
    assert out_train.shape == (B, S, D)
    scaled = ref / (1.0 - p_drop)
    ok = (out_train == 0) | (jnp.abs(out_train - scaled) < 1e-4)
    assert bool(jnp.all(ok)), "training output not a masked/rescaled add"

    print("KERNEL_OK")
</pallas_src>

<mosaic_0001>
module attributes {stable_mosaic.version = 11 : i64} {
  func.func @_pe_dropout_kernel(%arg0: i32, %arg1: i32, %arg2: memref<1xi32, #tpu.memory_space<smem>>, %arg3: memref<2x256xf32, #tpu.memory_space<vmem>>, %arg4: memref<1x256xf32, #tpu.memory_space<vmem>>, %arg5: memref<2x256xf32, #tpu.memory_space<vmem>>) attributes {dimension_semantics = [#tpu.dimension_semantics<parallel>, #tpu.dimension_semantics<parallel>], iteration_bounds = array<i64: 1, 1>, scalar_prefetch = 1 : i64, scratch_operands = 0 : i64, tpu.core_type = #tpu.core_type<tc>, window_params = [{transform_indices = @transform_0, window_bounds = array<i64: 2, 256>}, {transform_indices = @transform_1, window_bounds = array<i64: 1, 256>}, {transform_indices = @transform_2, window_bounds = array<i64: 2, 256>}]} {
    %c0 = arith.constant 0 : index
    %c0_0 = arith.constant 0 : index
    %0 = vector.load %arg3[%c0, %c0_0] : memref<2x256xf32, #tpu.memory_space<vmem>>, vector<2x256xf32>
    %c0_1 = arith.constant 0 : index
    %c0_2 = arith.constant 0 : index
    %1 = vector.load %arg4[%c0_1, %c0_2] : memref<1x256xf32, #tpu.memory_space<vmem>>, vector<1x256xf32>
    %2 = vector.broadcast %1 : vector<1x256xf32> to vector<2x256xf32>
    %3 = arith.addf %0, %2 : vector<2x256xf32>
    %c0_3 = arith.constant 0 : index
    %c0_4 = arith.constant 0 : index
    %4 = vector.load %arg5[%c0_3, %c0_4] : memref<2x256xf32, #tpu.memory_space<vmem>>, vector<2x256xf32>
    tpu.vector_store %arg5[%c0_3, %c0_4], %3 {strides = array<i32>} : memref<2x256xf32, #tpu.memory_space<vmem>>, vector<2x256xf32>,
    return
  }
  func.func @transform_0(%arg0: i32, %arg1: i32, %arg2: memref<1xi32, #tpu.memory_space<smem>>) -> (i32, i32) {
    %c0_i32 = arith.constant 0 : i32
    return %arg0, %arg1 : i32, i32
  }
  func.func @transform_1(%arg0: i32, %arg1: i32, %arg2: memref<1xi32, #tpu.memory_space<smem>>) -> (i32, i32) {
    %c0_i32 = arith.constant 0 : i32
    %c0_i32_0 = arith.constant 0 : i32
    return %c0_i32, %arg1 : i32, i32
  }
  func.func @transform_2(%arg0: i32, %arg1: i32, %arg2: memref<1xi32, #tpu.memory_space<smem>>) -> (i32, i32) {
    %c0_i32 = arith.constant 0 : i32
    return %arg0, %arg1 : i32, i32
  }
}

</mosaic_0001>

<llo_original>
// kernel: tpu_custom_call.1
$region0: #{tpu_custom_call.1}
  #allocation0 [shape = 'u32[]', space=smem, size = 0x4, offset = 0x4, fixed_abs, tag = 'smem constant byte address 0x4 - core index']
  #allocation1 [shape = 'u32[144,128]{1,0:T(1,128)}', space=vmem, size = 0x12000, scoped, tag = 'internal scratch']
  #allocation2 [shape = 's32[1]{0}', space=sflag, size = 0x4, scoped, tag = 'scoped memory for tpu_custom_call.1']
  #allocation3 [shape = 's32[1]{0:T(128)S(6)}', space=smem, size = 0x200, scoped, tag = 'prefetched SMEM operand 0']
  %s0 = inlined_call_operand.<no memory space> [shape: s32[1], index: 0, kind: input, shape index: {}]
  %s1 = inlined_call_operand.hbm [shape: f32[2,256], index: 1, kind: input, shape index: {}]
  %s2 = inlined_call_operand.vmem [shape: f32[1,256], index: 2, kind: input, shape index: {}]
  %s3 = inlined_call_operand.hbm [shape: f32[2,256], index: 3, kind: output, shape index: {}]
  %s4 = sld [smem:[#allocation0]]
  $region22: #{tpu_custom_call.1} parent=0
    _
  %s6 = ssub.s32 1, %s4
  %s7 = scalar_select 0, %s6, %s4
  %8 = sst [smem:[#allocation3]] %s0
  $region1: #{tpu_custom_call.1} parent=0
    #allocation4 [shape = 'u8[2048]{0}', space=vmem, size = 0x800, scoped, tag = 'input window, operand 1, single buffered']
    #allocation5 [shape = 's32[1]{0}', space=sflag, size = 0x4, scoped, tag = 'scoped memory for tpu_custom_call.1']
    #allocation6 [shape = 's32[1]{0}', space=sflag, size = 0x4, scoped, tag = 'scoped memory for tpu_custom_call.1']
    #allocation7 [shape = 'u8[2048]{0}', space=vmem, size = 0x800, scoped, tag = 'output window, operand 0, single buffered']
    %9 = vsyncpa [#allocation5], 0
    %10 = vsyncpa [#allocation6], 0
    // Predicated region
    $region2: #{tpu_custom_call.1} parent=1 // pred_check
      _
    $region3: #{tpu_custom_call.1} parent=1 // pred_check_branch
      %12 = sbr.rel (0) target = $region5
    $region4: #{tpu_custom_call.1} parent=1 // pred_region
      %s14 = ssub.s32 64, 64
      %15 = vsyncadd [#allocation5], %s14
      %s17 = sshll.u32 [#allocation4], 4
      %s18 = int_to_ptr.vmem [resolvable:$true] %s17
      %20 = dma.hbm_to_vmem [thread:$0]  %s1, 64, %s18, [#allocation5]
    $region5: #{tpu_custom_call.1} parent=1 // pred_fallthru
      _
    // Predicated region
    $region6: #{tpu_custom_call.1} parent=1 // pred_check
      _
    $region7: #{tpu_custom_call.1} parent=1 // pred_check_branch
      %22 = sbr.rel (0) target = $region9
    $region8: #{tpu_custom_call.1} parent=1 // pred_region
      _
    $region9: #{tpu_custom_call.1} parent=1 // pred_fallthru
      _
    // Predicated region
    $region10: #{tpu_custom_call.1} parent=1 // pred_check
      _
    $region11: #{tpu_custom_call.1} parent=1 // pred_check_branch
      %24 = sbr.rel (0) target = $region13
    $region12: #{tpu_custom_call.1} parent=1 // pred_region
      %25 = dma.done [#allocation5], 64
    $region13: #{tpu_custom_call.1} parent=1 // pred_fallthru
      _
    %v26 = vld [vmem:[#allocation4] sm:$0xf]
    %v27 = vld [vmem:[%s2] sm:$0x3]
    %v29 = vlaneseq
    %v30 = vshrl.u32 %v29, 7
    %v31 = vsub.s32 0, %v30
    %v32 = vrot.slane %v27, %v31
    %v33 = vlaneseq
    %v34 = vshrl.u32 %v33, 7
    %v35 = vsub.s32 1, %v34
    %v36 = vrot.slane %v27, %v35
    %v37 = vcombine.low %v32, %v36
    %v39 = vunpack.c.l.s4 1983009808
    %v40 = vunpack.c.0.s8 %v39
    %v41 = vlaneseq
    %v42 = vshrl.u32 %v41, 7
    %v43 = vsub.s32 %v40, %v42
    %v44 = vrot.slane %v37, %v43
    %v46 = vadd.f32 %v26, %v44
    %47 = vst [vmem:[#allocation7] sm:$0xf] %v46
    // Predicated region
    $region14: #{tpu_custom_call.1} parent=1 // pred_check
      _
    $region15: #{tpu_custom_call.1} parent=1 // pred_check_branch
      %49 = sbr.rel (0) target = $region17
    $region16: #{tpu_custom_call.1} parent=1 // pred_region
      %s51 = ssub.s32 64, 64
      %52 = vsyncadd [#allocation6], %s51
      %s54 = sshll.u32 [#allocation7], 4
      %s55 = int_to_ptr.vmem [resolvable:$true] %s54
      %57 = dma.vmem_to_hbm [thread:$0]  %s55, 64, %s3, [#allocation6]
    $region17: #{tpu_custom_call.1} parent=1 // pred_fallthru
      _
    // Predicated region
    $region18: #{tpu_custom_call.1} parent=1 // pred_check
      _
    $region19: #{tpu_custom_call.1} parent=1 // pred_check_branch
      %59 = sbr.rel (0) target = $region21
    $region20: #{tpu_custom_call.1} parent=1 // pred_region
      %60 = dma.done [#allocation6], 64
    $region21: #{tpu_custom_call.1} parent=1 // pred_fallthru
      _
    %61 = vsyncpa [#allocation5], 1
    %62 = vsyncpa [#allocation6], 1

</llo_original>
